<compile_context>
chip_gen: v7x
topology: tpu7x:2x2x1
jax: 0.10.0
libtpu: 0.0.40
codegen_flags: <defaults>
</compile_context>

<pallas_src>
import math
import numpy as np
import jax
import jax.numpy as jnp
from jax import lax
from jax.experimental import pallas as pl
from jax.experimental.pallas import tpu as pltpu


def _pick_tile(n, candidates=(512, 256, 128, 64, 32, 16, 8)):
    """Largest M-tile (multiple of 8) dividing n; fall back to full extent."""
    for t in candidates:
        if n % t == 0:
            return t
    return n


# ----------------------------- Pallas kernels ------------------------------ #

def _qkv_proj_kernel(xv_ref, xk_ref, xq_ref, wv_ref, wk_ref, wq_ref, b_ref, o_ref):
    # x*: (tm, Cin) f32, w*: (Cin, Cout) f32, b: (3, 1, Cout) f32
    # o : (3, tm, Cout) bf16   -- stacked [v_proj, k_proj, q_proj]
    xv = xv_ref[...].astype(jnp.bfloat16)
    xk = xk_ref[...].astype(jnp.bfloat16)
    xq = xq_ref[...].astype(jnp.bfloat16)
    wv = wv_ref[...].astype(jnp.bfloat16)
    wk = wk_ref[...].astype(jnp.bfloat16)
    wq = wq_ref[...].astype(jnp.bfloat16)
    o_ref[0] = (jnp.dot(xv, wv, preferred_element_type=jnp.float32)
                + b_ref[0]).astype(o_ref.dtype)
    o_ref[1] = (jnp.dot(xk, wk, preferred_element_type=jnp.float32)
                + b_ref[1]).astype(o_ref.dtype)
    o_ref[2] = (jnp.dot(xq, wq, preferred_element_type=jnp.float32)
                + b_ref[2]).astype(o_ref.dtype)


def _linear_kernel(x_ref, w_ref, b_ref, o_ref):
    # x: (tm, Cin), w: (Cin, Cout), b: (1, Cout) -> o: (tm, Cout)
    x = x_ref[...].astype(jnp.bfloat16)
    w = w_ref[...].astype(jnp.bfloat16)
    o_ref[...] = (jnp.dot(x, w, preferred_element_type=jnp.float32)
                  + b_ref[...]).astype(o_ref.dtype)


def _make_attn_kernel(split_num):
    def kernel(qkv_ref, mask_ref, o_ref):
        # qkv_ref : (3, 1, S, C) bf16  -> [v, k, q] slabs for this batch
        # mask_ref: (1, S, S) int8     -> combined key-mask | semantic-mask
        # o_ref   : (1, S, C) bf16     -> (S, H*D), head-major along C
        v_all = qkv_ref[0, 0]                    # (S, C) bf16
        k_all = qkv_ref[1, 0]                    # (S, C) bf16
        q_all = qkv_ref[2, 0]                    # (S, C) bf16  (scale pre-folded)
        S, C = q_all.shape
        D = C // split_num

        # single combined mask, computed once per batch and shared by all heads
        neg = mask_ref[0].astype(jnp.float32) != 0.0   # (S, S) bool

        for h in range(split_num):               # static unroll: H independent MXU chains
            lo, hi = h * D, (h + 1) * D
            q_h = q_all[:, lo:hi]                # (S, D) bf16
            k_h = k_all[:, lo:hi]                # (S, D) bf16
            v_h = v_all[:, lo:hi]                # (S, D) bf16

            # scores = q_h @ k_h^T  (contract last dims; f32 accumulation)
            s_h = lax.dot_general(q_h, k_h, (((1,), (1,)), ((), ())),
                                  preferred_element_type=jnp.float32)  # (S, S)
            s_h = jnp.where(neg, jnp.float32(-1e9), s_h)

            # softmax over keys (f32 elementwise, EUP reciprocal)
            m = jnp.max(s_h, axis=-1, keepdims=True)
            e = jnp.exp(s_h - m)
            denom = jnp.sum(e, axis=-1, keepdims=True)
            att = e * pl.reciprocal(denom, approx=True)

            # TODO(synk): dropout1 on att map skipped (eval-mode identity).
            out_h = jnp.dot(att.astype(v_h.dtype), v_h,
                            preferred_element_type=jnp.float32)        # (S, D)
            o_ref[0, :, lo:hi] = out_h.astype(o_ref.dtype)
    return kernel


# ------------------------------ Pallas wrappers ---------------------------- #

def pallas_qkv_proj(xv, xk, xq, wv, wk, wq, bv, bk, bq, out_dtype=jnp.bfloat16):
    """Fused v/k/q projections. x*: (M, Cin) -> (3, M, Cout) in out_dtype."""
    M, Cin = xv.shape
    Cout = wv.shape[1]
    b3 = jnp.stack([bv, bk, bq]).reshape(3, 1, Cout)
    tm = _pick_tile(M)
    x_spec = pl.BlockSpec((tm, Cin), lambda i: (i, 0))
    w_spec = pl.BlockSpec((Cin, Cout), lambda i: (0, 0))
    return pl.pallas_call(
        _qkv_proj_kernel,
        out_shape=jax.ShapeDtypeStruct((3, M, Cout), out_dtype),
        grid=(M // tm,),
        in_specs=[x_spec, x_spec, x_spec, w_spec, w_spec, w_spec,
                  pl.BlockSpec((3, 1, Cout), lambda i: (0, 0, 0))],
        out_specs=pl.BlockSpec((3, tm, Cout), lambda i: (0, i, 0)),
        compiler_params=pltpu.CompilerParams(
            dimension_semantics=("parallel",)),
    )(xv, xk, xq, wv, wk, wq, b3)


def pallas_linear(x, w, b, out_dtype=None):
    """x: (M, Cin), w: (Cin, Cout), b: (Cout,) -> (M, Cout). M-tiled + pipelined."""
    M, Cin = x.shape
    Cout = w.shape[1]
    out_dtype = out_dtype or x.dtype
    tm = _pick_tile(M)
    return pl.pallas_call(
        _linear_kernel,
        out_shape=jax.ShapeDtypeStruct((M, Cout), out_dtype),
        grid=(M // tm,),
        in_specs=[pl.BlockSpec((tm, Cin), lambda i: (i, 0)),
                  pl.BlockSpec((Cin, Cout), lambda i: (0, 0)),
                  pl.BlockSpec((1, Cout), lambda i: (0, 0))],
        out_specs=pl.BlockSpec((tm, Cout), lambda i: (i, 0)),
        compiler_params=pltpu.CompilerParams(
            dimension_semantics=("parallel",)),
    )(x, w, b.reshape(1, Cout))


def pallas_mhse_attention(qkv, comb_mask, split_num):
    """qkv: (3, B, S, C) bf16 stacked [v,k,q]; comb_mask: (B, S, S) int8."""
    _, B, S, C = qkv.shape
    return pl.pallas_call(
        _make_attn_kernel(split_num),
        out_shape=jax.ShapeDtypeStruct((B, S, C), qkv.dtype),
        grid=(B,),
        in_specs=[
            pl.BlockSpec((3, 1, S, C), lambda b: (0, b, 0, 0)),
            pl.BlockSpec((1, S, S), lambda b: (b, 0, 0)),
        ],
        out_specs=pl.BlockSpec((1, S, C), lambda b: (b, 0, 0)),
        compiler_params=pltpu.CompilerParams(
            dimension_semantics=("parallel",)),
    )(qkv, comb_mask)


def mhse_att_forward(params, v, k, q, mask, semask, split_num):
    """Pallas implementation of MHSEAtt.forward (eval mode)."""
    B, S, Cin = q.shape
    Cout = params["wq"].shape[1]
    D = Cout // split_num
    inv_sqrt_d = 1.0 / math.sqrt(D)

    # Fold the 1/sqrt(d_k) attention scale into the q projection (free).
    wq = params["wq"] * inv_sqrt_d
    bq = params["bq"] * inv_sqrt_d

    # Fused projections -> (3, B*S, Cout) bf16, stacked [v, k, q].
    qkv = pallas_qkv_proj(v.reshape(B * S, Cin),
                          k.reshape(B * S, Cin),
                          q.reshape(B * S, Cin),
                          params["wv"], params["wk"], wq,
                          params["bv"], params["bk"], bq)
    qkv = qkv.reshape(3, B, S, Cout)                       # free metadata reshape

    # Combine key-mask and semantic-mask once, shrink DMA to int8.
    comb = ((mask != 0) | (semask != 0)).astype(jnp.int8)  # (B, S, S)

    atted = pallas_mhse_attention(qkv, comb, split_num)    # (B, S, Cout) bf16
    out = pallas_linear(atted.reshape(B * S, Cout),
                        params["wm"], params["bm"], out_dtype=jnp.float32)
    return out.reshape(B, S, Cout)


# --------------------------- plain-JAX reference ---------------------------- #

def ref_forward(params, v, k, q, mask, semask, split_num):
    B, S, Cin = q.shape
    Cout = params["wq"].shape[1]
    D = Cout // split_num

    def lin(x, w, b):
        return x @ w + b

    def split(x):
        return jnp.transpose(x.reshape(B, S, split_num, D), (0, 2, 1, 3))

    vh = split(lin(v, params["wv"], params["bv"]))
    kh = split(lin(k, params["wk"], params["bk"]))
    qh = split(lin(q, params["wq"], params["bq"]))

    scores = jnp.einsum("bhqd,bhkd->bhqk", qh, kh) / math.sqrt(D)
    scores = jnp.where(mask[:, None, :, :] != 0, -1e9, scores)
    scores1 = jnp.where(semask[:, None, :, :] != 0, -1e9, scores)
    att = jax.nn.softmax(scores1, axis=-1)
    out = jnp.einsum("bhqk,bhkd->bhqd", att, vh)
    out = jnp.transpose(out, (0, 2, 1, 3)).reshape(B, S, Cout)
    return lin(out, params["wm"], params["bm"])


# ---------------------------------- main ------------------------------------ #

if __name__ == "__main__":
    B, S = 2, 8
    in_channels = out_channels = 32
    split_num = 4

    key = jax.random.PRNGKey(0)
    keys = jax.random.split(key, 12)

    def init_w(k, cin, cout):
        return jax.random.normal(k, (cin, cout), jnp.float32) * 0.05

    params = {
        "wv": init_w(keys[0], in_channels, out_channels),
        "bv": jax.random.normal(keys[1], (out_channels,), jnp.float32) * 0.01,
        "wk": init_w(keys[2], in_channels, out_channels),
        "bk": jax.random.normal(keys[3], (out_channels,), jnp.float32) * 0.01,
        "wq": init_w(keys[4], in_channels, out_channels),
        "bq": jax.random.normal(keys[5], (out_channels,), jnp.float32) * 0.01,
        "wm": init_w(keys[6], in_channels, out_channels),
        "bm": jax.random.normal(keys[7], (out_channels,), jnp.float32) * 0.01,
    }

    v_in = jax.random.normal(keys[8], (B, S, in_channels), jnp.float32)
    k_in = jax.random.normal(keys[9], (B, S, in_channels), jnp.float32)
    q_in = jax.random.normal(keys[10], (B, S, in_channels), jnp.float32)

    # mask: padded key positions (B,1,S); semask: pairwise semantic mask (B,S,S)
    mk = jax.random.split(keys[11], 2)
    mask = (jax.random.uniform(mk[0], (B, 1, S)) > 0.8).astype(jnp.int32)
    semask = (jax.random.uniform(mk[1], (B, S, S)) > 0.8).astype(jnp.int32)

    out = mhse_att_forward(params, v_in, k_in, q_in, mask, semask, split_num)
    out = jax.block_until_ready(out)

    ref = ref_forward(params, v_in, k_in, q_in, mask, semask, split_num)
    # bf16 MXU inputs + bf16 intermediates + approx reciprocal -> looser tolerance
    np.testing.assert_allclose(np.asarray(out), np.asarray(ref),
                               rtol=2e-2, atol=2e-2)
    print("KERNEL_OK")
</pallas_src>

<mosaic_0001>
module attributes {stable_mosaic.version = 11 : i64} {
  func.func @_qkv_proj_kernel(%arg0: i32, %arg1: memref<16x32xf32, #tpu.memory_space<vmem>>, %arg2: memref<16x32xf32, #tpu.memory_space<vmem>>, %arg3: memref<16x32xf32, #tpu.memory_space<vmem>>, %arg4: memref<32x32xf32, #tpu.memory_space<vmem>>, %arg5: memref<32x32xf32, #tpu.memory_space<vmem>>, %arg6: memref<32x32xf32, #tpu.memory_space<vmem>>, %arg7: memref<3x1x32xf32, #tpu.memory_space<vmem>>, %arg8: memref<3x16x32xbf16, #tpu.memory_space<vmem>>) attributes {dimension_semantics = [#tpu.dimension_semantics<parallel>], iteration_bounds = array<i64: 1>, scalar_prefetch = 0 : i64, scratch_operands = 0 : i64, tpu.core_type = #tpu.core_type<tc>, window_params = [{transform_indices = @transform_0, window_bounds = array<i64: 16, 32>}, {transform_indices = @transform_1, window_bounds = array<i64: 16, 32>}, {transform_indices = @transform_2, window_bounds = array<i64: 16, 32>}, {pipeline_mode = #tpu.pipeline_mode<synchronous>, transform_indices = @transform_3, window_bounds = array<i64: 32, 32>}, {pipeline_mode = #tpu.pipeline_mode<synchronous>, transform_indices = @transform_4, window_bounds = array<i64: 32, 32>}, {pipeline_mode = #tpu.pipeline_mode<synchronous>, transform_indices = @transform_5, window_bounds = array<i64: 32, 32>}, {pipeline_mode = #tpu.pipeline_mode<synchronous>, transform_indices = @transform_6, window_bounds = array<i64: 3, 1, 32>}, {transform_indices = @transform_7, window_bounds = array<i64: 3, 16, 32>}]} {
    %c0 = arith.constant 0 : index
    %c0_0 = arith.constant 0 : index
    %0 = vector.load %arg1[%c0, %c0_0] : memref<16x32xf32, #tpu.memory_space<vmem>>, vector<16x32xf32>
    %1 = arith.truncf %0 : vector<16x32xf32> to vector<16x32xbf16>
    %c0_1 = arith.constant 0 : index
    %c0_2 = arith.constant 0 : index
    %2 = vector.load %arg2[%c0_1, %c0_2] : memref<16x32xf32, #tpu.memory_space<vmem>>, vector<16x32xf32>
    %3 = arith.truncf %2 : vector<16x32xf32> to vector<16x32xbf16>
    %c0_3 = arith.constant 0 : index
    %c0_4 = arith.constant 0 : index
    %4 = vector.load %arg3[%c0_3, %c0_4] : memref<16x32xf32, #tpu.memory_space<vmem>>, vector<16x32xf32>
    %5 = arith.truncf %4 : vector<16x32xf32> to vector<16x32xbf16>
    %c0_5 = arith.constant 0 : index
    %c0_6 = arith.constant 0 : index
    %6 = vector.load %arg4[%c0_5, %c0_6] : memref<32x32xf32, #tpu.memory_space<vmem>>, vector<32x32xf32>
    %7 = arith.truncf %6 : vector<32x32xf32> to vector<32x32xbf16>
    %c0_7 = arith.constant 0 : index
    %c0_8 = arith.constant 0 : index
    %8 = vector.load %arg5[%c0_7, %c0_8] : memref<32x32xf32, #tpu.memory_space<vmem>>, vector<32x32xf32>
    %9 = arith.truncf %8 : vector<32x32xf32> to vector<32x32xbf16>
    %c0_9 = arith.constant 0 : index
    %c0_10 = arith.constant 0 : index
    %10 = vector.load %arg6[%c0_9, %c0_10] : memref<32x32xf32, #tpu.memory_space<vmem>>, vector<32x32xf32>
    %11 = arith.truncf %10 : vector<32x32xf32> to vector<32x32xbf16>
    %cst = arith.constant dense<0.000000e+00> : vector<16x32xf32>
    %12 = tpu.matmul %1, %7, %cst {dimension_numbers = #tpu.dot_dimension_numbers<[1], [0], [0], [1], [0, 0, 1, 1], [], []>} : vector<16x32xbf16>, vector<32x32xbf16>, vector<16x32xf32> -> vector<16x32xf32>
    %c0_11 = arith.constant 0 : index
    %c0_12 = arith.constant 0 : index
    %c0_13 = arith.constant 0 : index
    %13 = vector.load %arg7[%c0_11, %c0_12, %c0_13] : memref<3x1x32xf32, #tpu.memory_space<vmem>>, vector<1x1x32xf32>
    %14 = vector.shape_cast %13 : vector<1x1x32xf32> to vector<1x32xf32>
    %15 = vector.broadcast %14 : vector<1x32xf32> to vector<16x32xf32>
    %16 = arith.addf %12, %15 : vector<16x32xf32>
    %17 = arith.truncf %16 : vector<16x32xf32> to vector<16x32xbf16>
    %c0_14 = arith.constant 0 : index
    %c0_15 = arith.constant 0 : index
    %c0_16 = arith.constant 0 : index
    %18 = vector.load %arg8[%c0_14, %c0_15, %c0_16] : memref<3x16x32xbf16, #tpu.memory_space<vmem>>, vector<1x16x32xbf16>
    %19 = vector.shape_cast %18 : vector<1x16x32xbf16> to vector<16x32xbf16>
    %20 = vector.shape_cast %17 : vector<16x32xbf16> to vector<1x16x32xbf16>
    tpu.vector_store %arg8[%c0_14, %c0_15, %c0_16], %20 {strides = array<i32>} : memref<3x16x32xbf16, #tpu.memory_space<vmem>>, vector<1x16x32xbf16>,
    %cst_17 = arith.constant dense<0.000000e+00> : vector<16x32xf32>
    %21 = tpu.matmul %3, %9, %cst_17 {dimension_numbers = #tpu.dot_dimension_numbers<[1], [0], [0], [1], [0, 0, 1, 1], [], []>} : vector<16x32xbf16>, vector<32x32xbf16>, vector<16x32xf32> -> vector<16x32xf32>
    %c1 = arith.constant 1 : index
    %c0_18 = arith.constant 0 : index
    %c0_19 = arith.constant 0 : index
    %22 = vector.load %arg7[%c1, %c0_18, %c0_19] : memref<3x1x32xf32, #tpu.memory_space<vmem>>, vector<1x1x32xf32>
    %23 = vector.shape_cast %22 : vector<1x1x32xf32> to vector<1x32xf32>
    %24 = vector.broadcast %23 : vector<1x32xf32> to vector<16x32xf32>
    %25 = arith.addf %21, %24 : vector<16x32xf32>
    %26 = arith.truncf %25 : vector<16x32xf32> to vector<16x32xbf16>
    %c1_20 = arith.constant 1 : index
    %c0_21 = arith.constant 0 : index
    %c0_22 = arith.constant 0 : index
    %27 = vector.load %arg8[%c1_20, %c0_21, %c0_22] : memref<3x16x32xbf16, #tpu.memory_space<vmem>>, vector<1x16x32xbf16>
    %28 = vector.shape_cast %27 : vector<1x16x32xbf16> to vector<16x32xbf16>
    %29 = vector.shape_cast %26 : vector<16x32xbf16> to vector<1x16x32xbf16>
    tpu.vector_store %arg8[%c1_20, %c0_21, %c0_22], %29 {strides = array<i32>} : memref<3x16x32xbf16, #tpu.memory_space<vmem>>, vector<1x16x32xbf16>,
    %cst_23 = arith.constant dense<0.000000e+00> : vector<16x32xf32>
    %30 = tpu.matmul %5, %11, %cst_23 {dimension_numbers = #tpu.dot_dimension_numbers<[1], [0], [0], [1], [0, 0, 1, 1], [], []>} : vector<16x32xbf16>, vector<32x32xbf16>, vector<16x32xf32> -> vector<16x32xf32>
    %c2 = arith.constant 2 : index
    %c0_24 = arith.constant 0 : index
    %c0_25 = arith.constant 0 : index
    %31 = vector.load %arg7[%c2, %c0_24, %c0_25] : memref<3x1x32xf32, #tpu.memory_space<vmem>>, vector<1x1x32xf32>
    %32 = vector.shape_cast %31 : vector<1x1x32xf32> to vector<1x32xf32>
    %33 = vector.broadcast %32 : vector<1x32xf32> to vector<16x32xf32>
    %34 = arith.addf %30, %33 : vector<16x32xf32>
    %35 = arith.truncf %34 : vector<16x32xf32> to vector<16x32xbf16>
    %c2_26 = arith.constant 2 : index
    %c0_27 = arith.constant 0 : index
    %c0_28 = arith.constant 0 : index
    %36 = vector.load %arg8[%c2_26, %c0_27, %c0_28] : memref<3x16x32xbf16, #tpu.memory_space<vmem>>, vector<1x16x32xbf16>
    %37 = vector.shape_cast %36 : vector<1x16x32xbf16> to vector<16x32xbf16>
    %38 = vector.shape_cast %35 : vector<16x32xbf16> to vector<1x16x32xbf16>
    tpu.vector_store %arg8[%c2_26, %c0_27, %c0_28], %38 {strides = array<i32>} : memref<3x16x32xbf16, #tpu.memory_space<vmem>>, vector<1x16x32xbf16>,
    return
  }
  func.func @transform_0(%arg0: i32) -> (i32, i32) {
    %c0_i32 = arith.constant 0 : i32
    %c0_i32_0 = arith.constant 0 : i32
    return %arg0, %c0_i32 : i32, i32
  }
  func.func @transform_1(%arg0: i32) -> (i32, i32) {
    %c0_i32 = arith.constant 0 : i32
    %c0_i32_0 = arith.constant 0 : i32
    return %arg0, %c0_i32 : i32, i32
  }
  func.func @transform_2(%arg0: i32) -> (i32, i32) {
    %c0_i32 = arith.constant 0 : i32
    %c0_i32_0 = arith.constant 0 : i32
    return %arg0, %c0_i32 : i32, i32
  }
  func.func @transform_3(%arg0: i32) -> (i32, i32) {
    %c0_i32 = arith.constant 0 : i32
    %c0_i32_0 = arith.constant 0 : i32
    %c0_i32_1 = arith.constant 0 : i32
    return %c0_i32, %c0_i32_0 : i32, i32
  }
  func.func @transform_4(%arg0: i32) -> (i32, i32) {
    %c0_i32 = arith.constant 0 : i32
    %c0_i32_0 = arith.constant 0 : i32
    %c0_i32_1 = arith.constant 0 : i32
    return %c0_i32, %c0_i32_0 : i32, i32
  }
  func.func @transform_5(%arg0: i32) -> (i32, i32) {
    %c0_i32 = arith.constant 0 : i32
    %c0_i32_0 = arith.constant 0 : i32
    %c0_i32_1 = arith.constant 0 : i32
    return %c0_i32, %c0_i32_0 : i32, i32
  }
  func.func @transform_6(%arg0: i32) -> (i32, i32, i32) {
    %c0_i32 = arith.constant 0 : i32
    %c0_i32_0 = arith.constant 0 : i32
    %c0_i32_1 = arith.constant 0 : i32
    %c0_i32_2 = arith.constant 0 : i32
    return %c0_i32, %c0_i32_0, %c0_i32_1 : i32, i32, i32
  }
  func.func @transform_7(%arg0: i32) -> (i32, i32, i32) {
    %c0_i32 = arith.constant 0 : i32
    %c0_i32_0 = arith.constant 0 : i32
    %c0_i32_1 = arith.constant 0 : i32
    return %c0_i32, %arg0, %c0_i32_0 : i32, i32, i32
  }
}

</mosaic_0001>

<llo_original>
// kernel: tpu_custom_call.1
$region0: #{tpu_custom_call.1}
  #allocation0 [shape = 'u32[]', space=smem, size = 0x4, offset = 0x4, fixed_abs, tag = 'smem constant byte address 0x4 - core index']
  #allocation1 [shape = 'u32[144,128]{1,0:T(1,128)}', space=vmem, size = 0x12000, scoped, tag = 'internal scratch']
  %s0 = inlined_call_operand.hbm [shape: f32[16,32], index: 0, kind: input, shape index: {}]
  %s1 = inlined_call_operand.hbm [shape: f32[16,32], index: 1, kind: input, shape index: {}]
  %s2 = inlined_call_operand.hbm [shape: f32[16,32], index: 2, kind: input, shape index: {}]
  %s3 = inlined_call_operand.hbm [shape: f32[32,32], index: 3, kind: input, shape index: {}]
  %s4 = inlined_call_operand.hbm [shape: f32[32,32], index: 4, kind: input, shape index: {}]
  %s5 = inlined_call_operand.hbm [shape: f32[32,32], index: 5, kind: input, shape index: {}]
  %s6 = inlined_call_operand.vmem [shape: f32[3,1,32], index: 6, kind: input, shape index: {}]
  %s7 = inlined_call_operand.hbm [shape: bf16[3,16,32], index: 7, kind: output, shape index: {}]
  %s8 = sld [smem:[#allocation0]]
  $region62: #{tpu_custom_call.1} parent=0
    _
  %s10 = ssub.s32 1, %s8
  %s11 = scalar_select 0, %s10, %s8
  $region1: #{tpu_custom_call.1} parent=0
    #allocation2 [shape = 'u8[8192]{0}', space=vmem, size = 0x2000, scoped, tag = 'input window, operand 0, single buffered']
    #allocation3 [shape = 's32[1]{0}', space=sflag, size = 0x4, scoped, tag = 'scoped memory for tpu_custom_call.1']
    #allocation4 [shape = 's32[1]{0}', space=sflag, size = 0x4, scoped, tag = 'scoped memory for tpu_custom_call.1']
    #allocation5 [shape = 'u8[8192]{0}', space=vmem, size = 0x2000, scoped, tag = 'input window, operand 1, single buffered']
    #allocation6 [shape = 's32[1]{0}', space=sflag, size = 0x4, scoped, tag = 'scoped memory for tpu_custom_call.1']
    #allocation7 [shape = 'u8[8192]{0}', space=vmem, size = 0x2000, scoped, tag = 'input window, operand 2, single buffered']
    #allocation8 [shape = 'u8[16384]{0}', space=vmem, size = 0x4000, scoped, tag = 'input window, operand 3, single buffered']
    #allocation9 [shape = 's32[1]{0}', space=sflag, size = 0x4, scoped, tag = 'scoped memory for tpu_custom_call.1']
    #allocation10 [shape = 'u8[16384]{0}', space=vmem, size = 0x4000, scoped, tag = 'input window, operand 4, single buffered']
    #allocation11 [shape = 'u8[16384]{0}', space=vmem, size = 0x4000, scoped, tag = 'input window, operand 5, single buffered']
    #allocation12 [shape = 's32[1]{0}', space=sflag, size = 0x4, scoped, tag = 'scoped memory for tpu_custom_call.1']
    #allocation13 [shape = 'u8[12288]{0}', space=vmem, size = 0x3000, scoped, tag = 'output window, operand 0, single buffered']
    %12 = vsyncpa [#allocation3], 0
    %13 = vsyncpa [#allocation6], 0
    %14 = vsyncpa [#allocation9], 0
    %15 = vsyncpa [#allocation12], 0
    %16 = vsyncpa [#allocation4], 0
    // Predicated region
    $region2: #{tpu_custom_call.1} parent=1 // pred_check
      _
    $region3: #{tpu_custom_call.1} parent=1 // pred_check_branch
      %18 = sbr.rel (0) target = $region5
    $region4: #{tpu_custom_call.1} parent=1 // pred_region
      %s20 = ssub.s32 256, 256
      %21 = vsyncadd [#allocation3], %s20
      %s22 = sshll.u32 [#allocation2], 4
      %s23 = int_to_ptr.vmem [resolvable:$true] %s22
      %28 = dma.hbm_to_vmem [thread:$0]  %s0, 256, %s23, [#allocation3], 128, 128, 8
    $region5: #{tpu_custom_call.1} parent=1 // pred_fallthru
      _
    // Predicated region
    $region6: #{tpu_custom_call.1} parent=1 // pred_check
      _
    $region7: #{tpu_custom_call.1} parent=1 // pred_check_branch
      %30 = sbr.rel (0) target = $region9
    $region8: #{tpu_custom_call.1} parent=1 // pred_region
      %s32 = ssub.s32 256, 256
      %33 = vsyncadd [#allocation6], %s32
      %s34 = sshll.u32 [#allocation5], 4
      %s35 = int_to_ptr.vmem [resolvable:$true] %s34
      %40 = dma.hbm_to_vmem [thread:$0]  %s1, 256, %s35, [#allocation6], 128, 128, 8
    $region9: #{tpu_custom_call.1} parent=1 // pred_fallthru
      _
    // Predicated region
    $region10: #{tpu_custom_call.1} parent=1 // pred_check
      _
    $region11: #{tpu_custom_call.1} parent=1 // pred_check_branch
      %42 = sbr.rel (0) target = $region13
    $region12: #{tpu_custom_call.1} parent=1 // pred_region
      %s44 = ssub.s32 256, 256
      %45 = vsyncadd [#allocation6], %s44
      %s46 = sshll.u32 [#allocation7], 4
      %s47 = int_to_ptr.vmem [resolvable:$true] %s46
      %52 = dma.hbm_to_vmem [thread:$0]  %s2, 256, %s47, [#allocation6], 128, 128, 8
    $region13: #{tpu_custom_call.1} parent=1 // pred_fallthru
      _
    // Predicated region
    $region14: #{tpu_custom_call.1} parent=1 // pred_check
      _
    $region15: #{tpu_custom_call.1} parent=1 // pred_check_branch
      %54 = sbr.rel (0) target = $region17
    $region16: #{tpu_custom_call.1} parent=1 // pred_region
      %s56 = ssub.s32 512, 512
      %57 = vsyncadd [#allocation9], %s56
      %s58 = sshll.u32 [#allocation8], 4
      %s59 = int_to_ptr.vmem [resolvable:$true] %s58
      %64 = dma.hbm_to_vmem [thread:$0]  %s3, 512, %s59, [#allocation9], 128, 128, 8
    $region17: #{tpu_custom_call.1} parent=1 // pred_fallthru
      _
    // Predicated region
    $region18: #{tpu_custom_call.1} parent=1 // pred_check
      _
    $region19: #{tpu_custom_call.1} parent=1 // pred_check_branch
      %66 = sbr.rel (0) target = $region21
    $region20: #{tpu_custom_call.1} parent=1 // pred_region
      %s68 = ssub.s32 512, 512
      %69 = vsyncadd [#allocation9], %s68
      %s70 = sshll.u32 [#allocation10], 4
      %s71 = int_to_ptr.vmem [resolvable:$true] %s70
      %76 = dma.hbm_to_vmem [thread:$0]  %s4, 512, %s71, [#allocation9], 128, 128, 8
    $region21: #{tpu_custom_call.1} parent=1 // pred_fallthru
      _
    // Predicated region
    $region22: #{tpu_custom_call.1} parent=1 // pred_check
      _
    $region23: #{tpu_custom_call.1} parent=1 // pred_check_branch
      %78 = sbr.rel (0) target = $region25
    $region24: #{tpu_custom_call.1} parent=1 // pred_region
      %s80 = ssub.s32 512, 512
      %81 = vsyncadd [#allocation12], %s80
      %s82 = sshll.u32 [#allocation11], 4
      %s83 = int_to_ptr.vmem [resolvable:$true] %s82
      %88 = dma.hbm_to_vmem [thread:$0]  %s5, 512, %s83, [#allocation12], 128, 128, 8
    $region25: #{tpu_custom_call.1} parent=1 // pred_fallthru
      _
    // Predicated region
    $region26: #{tpu_custom_call.1} parent=1 // pred_check
      _
    $region27: #{tpu_custom_call.1} parent=1 // pred_check_branch
      %90 = sbr.rel (0) target = $region29
    $region28: #{tpu_custom_call.1} parent=1 // pred_region
      _
    $region29: #{tpu_custom_call.1} parent=1 // pred_fallthru
      _
    // Predicated region
    $region30: #{tpu_custom_call.1} parent=1 // pred_check
      _
    $region31: #{tpu_custom_call.1} parent=1 // pred_check_branch
      %92 = sbr.rel (0) target = $region33
    $region32: #{tpu_custom_call.1} parent=1 // pred_region
      %93 = dma.done [#allocation3], 256
    $region33: #{tpu_custom_call.1} parent=1 // pred_fallthru
      _
    // Predicated region
    $region34: #{tpu_custom_call.1} parent=1 // pred_check
      _
    $region35: #{tpu_custom_call.1} parent=1 // pred_check_branch
      %95 = sbr.rel (0) target = $region37
    $region36: #{tpu_custom_call.1} parent=1 // pred_region
      %96 = dma.done [#allocation6], 256
    $region37: #{tpu_custom_call.1} parent=1 // pred_fallthru
      _
    // Predicated region
    $region38: #{tpu_custom_call.1} parent=1 // pred_check
      _
    $region39: #{tpu_custom_call.1} parent=1 // pred_check_branch
      %98 = sbr.rel (0) target = $region41
    $region40: #{tpu_custom_call.1} parent=1 // pred_region
      %99 = dma.done [#allocation6], 256
    $region41: #{tpu_custom_call.1} parent=1 // pred_fallthru
      _
    // Predicated region
    $region42: #{tpu_custom_call.1} parent=1 // pred_check
      _
    $region43: #{tpu_custom_call.1} parent=1 // pred_check_branch
      %101 = sbr.rel (0) target = $region45
    $region44: #{tpu_custom_call.1} parent=1 // pred_region
      %102 = dma.done [#allocation9], 512
    $region45: #{tpu_custom_call.1} parent=1 // pred_fallthru
      _
    // Predicated region
    $region46: #{tpu_custom_call.1} parent=1 // pred_check
      _
    $region47: #{tpu_custom_call.1} parent=1 // pred_check_branch
      %104 = sbr.rel (0) target = $region49
    $region48: #{tpu_custom_call.1} parent=1 // pred_region
      %105 = dma.done [#allocation9], 512
    $region49: #{tpu_custom_call.1} parent=1 // pred_fallthru
      _
    // Predicated region
    $region50: #{tpu_custom_call.1} parent=1 // pred_check
      _
    $region51: #{tpu_custom_call.1} parent=1 // pred_check_branch
      %107 = sbr.rel (0) target = $region53
    $region52: #{tpu_custom_call.1} parent=1 // pred_region
      %108 = dma.done [#allocation12], 512
    $region53: #{tpu_custom_call.1} parent=1 // pred_fallthru
      _
    %v110 = vld [vmem:[#allocation2] sm:$0xff]
    %v111 = vld [vmem:[#allocation2 + $0x8] sm:$0xff]
    %v112 = vpack.c.bf16 %v111, %v110
    %v113 = vld [vmem:[#allocation5] sm:$0xff]
    %v114 = vld [vmem:[#allocation5 + $0x8] sm:$0xff]
    %v115 = vpack.c.bf16 %v114, %v113
    %v116 = vld [vmem:[#allocation7] sm:$0xff]
    %v117 = vld [vmem:[#allocation7 + $0x8] sm:$0xff]
    %v118 = vpack.c.bf16 %v117, %v116
    %v119 = vld [vmem:[#allocation8] sm:$0xff]
    %v120 = vld [vmem:[#allocation8 + $0x8] sm:$0xff]
    %v121 = vld [vmem:[#allocation8 + $0x10] sm:$0xff]
    %v122 = vld [vmem:[#allocation8 + $0x18] sm:$0xff]
    %v123 = vpack.c.bf16 %v120, %v119
    %v124 = vpack.c.bf16 %v122, %v121
    %v125 = vld [vmem:[#allocation10] sm:$0xff]
    %v126 = vld [vmem:[#allocation10 + $0x8] sm:$0xff]
    %v127 = vld [vmem:[#allocation10 + $0x10] sm:$0xff]
    %v128 = vld [vmem:[#allocation10 + $0x18] sm:$0xff]
    %v129 = vpack.c.bf16 %v126, %v125
    %v130 = vpack.c.bf16 %v128, %v127
    %v131 = vld [vmem:[#allocation11] sm:$0xff]
    %v132 = vld [vmem:[#allocation11 + $0x8] sm:$0xff]
    %v133 = vld [vmem:[#allocation11 + $0x10] sm:$0xff]
    %v134 = vld [vmem:[#allocation11 + $0x18] sm:$0xff]
    %v135 = vpack.c.bf16 %v132, %v131
    %v136 = vpack.c.bf16 %v134, %v133
    %v137 = vld [vmem:[%s6] sm:$0x1]
    %v139 = vlaneseq
    %v140 = vshrl.u32 %v139, 7
    %v141 = vsub.s32 0, %v140
    %v142 = vrot.slane %v137, %v141
    %vm144 = vcmask 261120
    %v146 = vsel %vm144, %v112, 0
    %148 = vmatprep.subr.bf16.mxu0 0
    %149 = vmatpush1.bf16.msra.mxu0 %v123
    %150 = vmatprep.subr.bf16.mxu0 0
    %151 = vmatpush1.bf16.msra.mxu0 %v124
    %152 = vmatprep.subr.bf16.mxu0 0
    %153 = vmatpush1.bf16.msra.mxu0 0
    %154 = vmatprep.subr.bf16.mxu0 0
    %155 = vmatpush1.bf16.msra.mxu0 0
    %156 = vmatprep.subr.bf16.mxu0 0
    %157 = vmatpush1.bf16.msra.mxu0 0
    %158 = vmatprep.subr.bf16.mxu0 0
    %159 = vmatpush1.bf16.msra.mxu0 0
    %160 = vmatprep.subr.bf16.mxu0 0
    %161 = vmatpush1.bf16.msra.mxu0 0
    %162 = vmatprep.subr.bf16.mxu0 0
    %163 = vmatpush1.bf16.msra.mxu0 0
    %164 = vmatprep.subr.bf16.mxu0 0
    %165 = vmatpush1.bf16.msra.mxu0 0
    %166 = vmatprep.subr.bf16.mxu0 0
    %167 = vmatpush1.bf16.msra.mxu0 0
    %168 = vmatprep.subr.bf16.mxu0 0
    %169 = vmatpush1.bf16.msra.mxu0 0
    %170 = vmatprep.subr.bf16.mxu0 0
    %171 = vmatpush1.bf16.msra.mxu0 0
    %172 = vmatprep.subr.bf16.mxu0 0
    %173 = vmatpush1.bf16.msra.mxu0 0
    %174 = vmatprep.subr.bf16.mxu0 0
    %175 = vmatpush1.bf16.msra.mxu0 0
    %176 = vmatprep.subr.bf16.mxu0 0
    %177 = vmatpush1.bf16.msra.mxu0 0
    %178 = vmatprep.subr.bf16.mxu0 0
    %179 = vmatpush1.bf16.msra.mxu0 0
    %180 = vmatprep.mubr.bf16.mxu0 0
    %181 = vmatmul.mubr.bf16.gmra.mrb[0].mxu0 %v146
    %v182 = vpop.f32.mrb[0].mxu0
    %v183 = vadd.f32 %v142, %v182
    %v184 = vpop.f32.mrb[0].mxu0
    %v185 = vpop.f32.mrb[0].mxu0
    %v186 = vadd.f32 %v142, %v185
    %v187 = vpop.f32.mrb[0].mxu0
    %188 = vdwg.mxu0
    %v189 = vpack.c.bf16 %v186, %v183
    %v191 = vunpack.c.l.b16 %v189
    %v192 = vunpack.c.h.b16 %v189
    %v193 = vpack.c.b16 %v191, %v191
    %v194 = vpack.c.b16 %v192, %v192
    %vm197 = vcmask 257024
    %198 = vst.msk [vmem:[#allocation13] sm:$0xf] %vm197, %v193
    %199 = vst.msk [vmem:[#allocation13 + $0x4] sm:$0xf] %vm197, %v194
    %s200 = scalar_lea.vmem %s6, 1
    %v201 = vld [vmem:[%s200] sm:$0x1]
    %v203 = vlaneseq
    %v204 = vshrl.u32 %v203, 7
    %v205 = vsub.s32 0, %v204
    %v206 = vrot.slane %v201, %v205
    %v209 = vsel %vm144, %v115, 0
    %211 = vmatprep.subr.bf16.mxu0 0
    %212 = vmatpush1.bf16.msra.mxu0 %v129
    %213 = vmatprep.subr.bf16.mxu0 0
    %214 = vmatpush1.bf16.msra.mxu0 %v130
    %215 = vmatprep.subr.bf16.mxu0 0
    %216 = vmatpush1.bf16.msra.mxu0 0
    %217 = vmatprep.subr.bf16.mxu0 0
    %218 = vmatpush1.bf16.msra.mxu0 0
    %219 = vmatprep.subr.bf16.mxu0 0
    %220 = vmatpush1.bf16.msra.mxu0 0
    %221 = vmatprep.subr.bf16.mxu0 0
    %222 = vmatpush1.bf16.msra.mxu0 0
    %223 = vmatprep.subr.bf16.mxu0 0
    %224 = vmatpush1.bf16.msra.mxu0 0
    %225 = vmatprep.subr.bf16.mxu0 0
    %226 = vmatpush1.bf16.msra.mxu0 0
    %227 = vmatprep.subr.bf16.mxu0 0
    %228 = vmatpush1.bf16.msra.mxu0 0
    %229 = vmatprep.subr.bf16.mxu0 0
    %230 = vmatpush1.bf16.msra.mxu0 0
    %231 = vmatprep.subr.bf16.mxu0 0
    %232 = vmatpush1.bf16.msra.mxu0 0
    %233 = vmatprep.subr.bf16.mxu0 0
    %234 = vmatpush1.bf16.msra.mxu0 0
    %235 = vmatprep.subr.bf16.mxu0 0
    %236 = vmatpush1.bf16.msra.mxu0 0
    %237 = vmatprep.subr.bf16.mxu0 0
    %238 = vmatpush1.bf16.msra.mxu0 0
    %239 = vmatprep.subr.bf16.mxu0 0
    %240 = vmatpush1.bf16.msra.mxu0 0
    %241 = vmatprep.subr.bf16.mxu0 0
    %242 = vmatpush1.bf16.msra.mxu0 0
    %243 = vmatprep.mubr.bf16.mxu0 0
    %244 = vmatmul.mubr.bf16.gmra.mrb[0].mxu0 %v209
    %v245 = vpop.f32.mrb[0].mxu0
    %v246 = vadd.f32 %v206, %v245
    %v247 = vpop.f32.mrb[0].mxu0
    %v248 = vpop.f32.mrb[0].mxu0
    %v249 = vadd.f32 %v206, %v248
    %v250 = vpop.f32.mrb[0].mxu0
    %251 = vdwg.mxu0
    %v252 = vpack.c.bf16 %v249, %v246
    %v254 = vunpack.c.l.b16 %v252
    %v255 = vunpack.c.h.b16 %v252
    %v256 = vpack.c.b16 %v254, %v254
    %v257 = vpack.c.b16 %v255, %v255
    %s260 = scalar_lea.vmem [#allocation13], 8
    %261 = vst.msk [vmem:[%s260] sm:$0xf] %vm197, %v256
    %262 = vst.msk [vmem:[%s260 + $0x4] sm:$0xf] %vm197, %v257
    %s263 = scalar_lea.vmem %s6, 2
    %v264 = vld [vmem:[%s263] sm:$0x1]
    %v266 = vlaneseq
    %v267 = vshrl.u32 %v266, 7
    %v268 = vsub.s32 0, %v267
    %v269 = vrot.slane %v264, %v268
    %v272 = vsel %vm144, %v118, 0
    %274 = vmatprep.subr.bf16.mxu0 0
    %275 = vmatpush1.bf16.msra.mxu0 %v135
    %276 = vmatprep.subr.bf16.mxu0 0
    %277 = vmatpush1.bf16.msra.mxu0 %v136
    %278 = vmatprep.subr.bf16.mxu0 0
    %279 = vmatpush1.bf16.msra.mxu0 0
    %280 = vmatprep.subr.bf16.mxu0 0
    %281 = vmatpush1.bf16.msra.mxu0 0
    %282 = vmatprep.subr.bf16.mxu0 0
    %283 = vmatpush1.bf16.msra.mxu0 0
    %284 = vmatprep.subr.bf16.mxu0 0
    %285 = vmatpush1.bf16.msra.mxu0 0
    %286 = vmatprep.subr.bf16.mxu0 0
    %287 = vmatpush1.bf16.msra.mxu0 0
    %288 = vmatprep.subr.bf16.mxu0 0
    %289 = vmatpush1.bf16.msra.mxu0 0
    %290 = vmatprep.subr.bf16.mxu0 0
    %291 = vmatpush1.bf16.msra.mxu0 0
    %292 = vmatprep.subr.bf16.mxu0 0
    %293 = vmatpush1.bf16.msra.mxu0 0
    %294 = vmatprep.subr.bf16.mxu0 0
    %295 = vmatpush1.bf16.msra.mxu0 0
    %296 = vmatprep.subr.bf16.mxu0 0
    %297 = vmatpush1.bf16.msra.mxu0 0
    %298 = vmatprep.subr.bf16.mxu0 0
    %299 = vmatpush1.bf16.msra.mxu0 0
    %300 = vmatprep.subr.bf16.mxu0 0
    %301 = vmatpush1.bf16.msra.mxu0 0
    %302 = vmatprep.subr.bf16.mxu0 0
    %303 = vmatpush1.bf16.msra.mxu0 0
    %304 = vmatprep.subr.bf16.mxu0 0
    %305 = vmatpush1.bf16.msra.mxu0 0
    %306 = vmatprep.mubr.bf16.mxu0 0
    %307 = vmatmul.mubr.bf16.gmra.mrb[0].mxu0 %v272
    %v308 = vpop.f32.mrb[0].mxu0
    %v309 = vadd.f32 %v269, %v308
    %v310 = vpop.f32.mrb[0].mxu0
    %v311 = vpop.f32.mrb[0].mxu0
    %v312 = vadd.f32 %v269, %v311
    %v313 = vpop.f32.mrb[0].mxu0
    %314 = vdwg.mxu0
    %v315 = vpack.c.bf16 %v312, %v309
    %v317 = vunpack.c.l.b16 %v315
    %v318 = vunpack.c.h.b16 %v315
    %v319 = vpack.c.b16 %v317, %v317
    %v320 = vpack.c.b16 %v318, %v318
    %s323 = scalar_lea.vmem [#allocation13], 16
    %324 = vst.msk [vmem:[%s323] sm:$0xf] %vm197, %v319
    %325 = vst.msk [vmem:[%s323 + $0x4] sm:$0xf] %vm197, %v320
    // Predicated region
    $region54: #{tpu_custom_call.1} parent=1 // pred_check
      _
    $region55: #{tpu_custom_call.1} parent=1 // pred_check_branch
      %327 = sbr.rel (0) target = $region57
    $region56: #{tpu_custom_call.1} parent=1 // pred_region
      %s329 = ssub.s32 384, 384
      %330 = vsyncadd [#allocation4], %s329
      %s331 = sshll.u32 [#allocation13], 4
      %s332 = int_to_ptr.vmem [resolvable:$true] %s331
      %337 = dma.vmem_to_hbm [thread:$0]  %s332, 384, %s7, [#allocation4], 64, 64, 4
    $region57: #{tpu_custom_call.1} parent=1 // pred_fallthru
      _
    // Predicated region
    $region58: #{tpu_custom_call.1} parent=1 // pred_check
      _
    $region59: #{tpu_custom_call.1} parent=1 // pred_check_branch
      %339 = sbr.rel (0) target = $region61
    $region60: #{tpu_custom_call.1} parent=1 // pred_region
      %340 = dma.done [#allocation4], 384
    $region61: #{tpu_custom_call.1} parent=1 // pred_fallthru
      _
    %341 = vsyncpa [#allocation3], 1
    %342 = vsyncpa [#allocation6], 1
    %343 = vsyncpa [#allocation9], 1
    %344 = vsyncpa [#allocation12], 1
    %345 = vsyncpa [#allocation4], 1

</llo_original>
